<compile_context>
chip_gen: v7x
topology: tpu7x:2x2x1
jax: 0.10.0
libtpu: 0.0.40
codegen_flags: <defaults>
</compile_context>

<pallas_src>
import functools

import jax
import jax.numpy as jnp
from jax.experimental import pallas as pl
from jax.experimental.pallas import tpu as pltpu


_ACC_ROWS = 8  # f32 sublane count; the resident accumulator block is (8, td)


def _ssq_partial_kernel(e1_ref, e2_ref, o_ref, *, b_total, d_total, tb, td,
                        steps, mask_rows, mask_cols):
    """Accumulate per-lane partial sums of (e1 - e2)^2 into an (8, td) block."""
    s = pl.program_id(0)   # batch split (megacore sharding on 2-TC parts)
    j = pl.program_id(1)   # feature (D) block
    i = pl.program_id(2)   # batch reduction step (output block resident here)

    @pl.when(i == 0)
    def _():
        o_ref[...] = jnp.zeros_like(o_ref)

    # Hot loop: native-dtype DMA, cast-in-kernel, elementwise square on the VPU.
    diff = e1_ref[...].astype(jnp.float32) - e2_ref[...].astype(jnp.float32)
    sq = diff * diff

    # In-kernel ragged-tail handling (replaces the old wrapper-side jnp.pad):
    # rows >= B (and, defensively, cols >= D) contribute exactly zero.
    if mask_rows or mask_cols:
        mask = None
        if mask_rows:
            row0 = (s * steps + i) * tb
            rows = jax.lax.broadcasted_iota(jnp.int32, (tb, td), 0) + row0
            mask = rows < b_total
        if mask_cols:
            col0 = j * td
            cols = jax.lax.broadcasted_iota(jnp.int32, (tb, td), 1) + col0
            cmask = cols < d_total
            mask = cmask if mask is None else jnp.logical_and(mask, cmask)
        sq = jnp.where(mask, sq, jnp.float32(0.0))

    # Fold groups of 8 sublanes into the resident (8, td) accumulator:
    # pure VPU vreg adds, no per-step cross-sublane (XLU) reduce.
    o_ref[...] += jnp.sum(sq.reshape(tb // _ACC_ROWS, _ACC_ROWS, td), axis=0)


def _round_up(x, m):
    return (x + m - 1) // m * m


def _tpu_vmem_capacity_bytes():
    try:
        return int(pltpu.get_tpu_info().vmem_capacity_bytes)
    except Exception:
        return 64 * 1024 * 1024  # conservative (v7x-sized) default


def _sum_sq_diff_pallas(emb1, emb2, *, tile_budget_bytes=None):
    """Global sum of (emb1 - emb2)^2 as a Pallas streaming reduction."""
    B, D = emb1.shape
    itemsize = jnp.dtype(emb1.dtype).itemsize
    # Sublane packing multiple: 8 for 4-byte, 16 for 2-byte, 32 for 1-byte.
    pack = max(8, 32 // itemsize)

    # Generation-aware VMEM budgets / core split.
    vmem_cap = _tpu_vmem_capacity_bytes()
    if vmem_cap <= 96 * 1024 * 1024:
        # v7x-class: 64 MiB VMEM per TC, 2 TensorCores.
        n_split_max = 2
        default_budget = 3 * 1024 * 1024
        vmem_limit = 40 * 1024 * 1024
    else:
        # v5e/v6e-class: 128 MiB VMEM, single TensorCore (split buys nothing).
        n_split_max = 1
        default_budget = 8 * 1024 * 1024
        vmem_limit = 96 * 1024 * 1024
    if tile_budget_bytes is None:
        tile_budget_bytes = default_budget

    # Feature (D) tiling: keep full rows if a pack-row block fits the budget,
    # otherwise split D into lane-aligned (multiple-of-128) chunks.
    if pack * D * itemsize <= tile_budget_bytes:
        td = D
    else:
        td = max(128, (tile_budget_bytes // (pack * itemsize)) // 128 * 128)
        td = min(td, _round_up(D, 128))
    d_blocks = pl.cdiv(D, td)

    # Batch tiling: as many pack-aligned rows as fit the budget.
    max_rows = max(pack, (tile_budget_bytes // (td * itemsize)) // pack * pack)
    tb = min(max_rows, _round_up(B, pack))

    total_steps = pl.cdiv(B, tb)
    n_split = n_split_max if total_steps >= n_split_max else 1
    steps = pl.cdiv(total_steps, n_split)

    mask_rows = n_split * steps * tb > B
    mask_cols = d_blocks * td > D

    kernel = functools.partial(
        _ssq_partial_kernel, b_total=B, d_total=D, tb=tb, td=td,
        steps=steps, mask_rows=mask_rows, mask_cols=mask_cols)

    cost = pl.CostEstimate(
        flops=3 * B * D,
        transcendentals=0,
        bytes_accessed=2 * B * D * itemsize + n_split * _ACC_ROWS * D * 4)

    partials = pl.pallas_call(
        kernel,
        out_shape=jax.ShapeDtypeStruct((n_split, _ACC_ROWS, D), jnp.float32),
        grid_spec=pltpu.PrefetchScalarGridSpec(
            num_scalar_prefetch=0,
            grid=(n_split, d_blocks, steps),
            in_specs=[
                pl.BlockSpec((tb, td), lambda s, j, i: (s * steps + i, j)),
                pl.BlockSpec((tb, td), lambda s, j, i: (s * steps + i, j)),
            ],
            # Leading dim squeezed; each (split, d-block) accumulates into its
            # own resident (8, td) output block across the batch axis.
            out_specs=pl.BlockSpec((None, _ACC_ROWS, td),
                                   lambda s, j, i: (s, 0, j)),
        ),
        compiler_params=pltpu.CompilerParams(
            dimension_semantics=("parallel", "arbitrary", "arbitrary"),
            vmem_limit_bytes=vmem_limit),
        cost_estimate=cost,
    )(emb1, emb2)

    # Final O(D) + O(1) combine outside the kernel.
    return jnp.sum(partials)


def contrastive_loss(emb1, emb2, label, *, margin=1.0,
                     tile_budget_bytes=None, force_pallas=False):
    """Pallas TPU ContrastiveLoss forward. emb1, emb2: (B, D); label: (B,)."""
    B, D = emb1.shape
    assert emb2.shape == (B, D)

    itemsize = jnp.dtype(emb1.dtype).itemsize
    pack = max(8, 32 // itemsize)

    # Small-input fast path: below ~1 MiB the fixed pallas_call/pipeline
    # overhead dominates; XLA's fused reduction is faster there.
    input_bytes = 2 * B * D * itemsize
    small = (input_bytes < (1 << 20)) or (B < pack)
    if small and not force_pallas:
        diff = emb1.astype(jnp.float32) - emb2.astype(jnp.float32)
        ssq = jnp.sum(diff * diff)
    else:
        ssq = _sum_sq_diff_pallas(emb1, emb2, tile_budget_bytes=tile_budget_bytes)

    d = jnp.sqrt(ssq)
    # mean(label) is computed over the real (unpadded) labels -- no padding
    # exists anywhere in this implementation.
    lab_mean = jnp.mean(label.astype(jnp.float32))
    hinge = jnp.maximum(jnp.float32(margin) - d, jnp.float32(0.0))
    return (1.0 - lab_mean) * d * d + lab_mean * hinge * hinge


def _reference(emb1, emb2, label, margin):
    d = jnp.sqrt(jnp.sum(
        (emb1.astype(jnp.float32) - emb2.astype(jnp.float32)) ** 2))
    return jnp.mean((1.0 - label) * d ** 2
                    + label * jnp.maximum(margin - d, 0.0) ** 2)


if __name__ == "__main__":
    key = jax.random.PRNGKey(0)
    k1, k2, k3 = jax.random.split(key, 3)
    margin = 1.0

    # --- 1) Small canonical shapes: fast path AND forced Pallas path. ---
    B, D = 16, 128
    emb1 = jax.random.normal(k1, (B, D), dtype=jnp.float32)
    emb2 = jax.random.normal(k2, (B, D), dtype=jnp.float32)
    label = (jax.random.uniform(k3, (B,)) > 0.5).astype(jnp.float32)

    ref = _reference(emb1, emb2, label, margin)
    loss_fast = jax.block_until_ready(
        contrastive_loss(emb1, emb2, label, margin=margin))
    loss_pallas = jax.block_until_ready(
        contrastive_loss(emb1, emb2, label, margin=margin, force_pallas=True))
    assert jnp.allclose(loss_fast, ref, rtol=1e-5, atol=1e-5), (loss_fast, ref)
    assert jnp.allclose(loss_pallas, ref, rtol=1e-5, atol=1e-5), (loss_pallas, ref)

    # --- 2) Ragged batch (B not a multiple of 8): in-kernel row masking. ---
    B2, D2 = 1037, 384
    k4, k5, k6 = jax.random.split(jax.random.PRNGKey(1), 3)
    e1b = jax.random.normal(k4, (B2, D2), dtype=jnp.float32)
    e2b = jax.random.normal(k5, (B2, D2), dtype=jnp.float32)
    lb = (jax.random.uniform(k6, (B2,)) > 0.5).astype(jnp.float32)
    loss2 = jax.block_until_ready(contrastive_loss(e1b, e2b, lb, margin=margin))
    ref2 = _reference(e1b, e2b, lb, margin)
    assert jnp.allclose(loss2, ref2, rtol=2e-4, atol=1e-2), (loss2, ref2)

    # --- 3) Force the D-split + column-mask path with a tiny tile budget. ---
    B3, D3 = 301, 1000
    k7, k8, k9 = jax.random.split(jax.random.PRNGKey(2), 3)
    e1c = jax.random.normal(k7, (B3, D3), dtype=jnp.float32)
    e2c = jax.random.normal(k8, (B3, D3), dtype=jnp.float32)
    lc = (jax.random.uniform(k9, (B3,)) > 0.5).astype(jnp.float32)
    loss3 = jax.block_until_ready(
        contrastive_loss(e1c, e2c, lc, margin=margin,
                         tile_budget_bytes=16 * 1024, force_pallas=True))
    ref3 = _reference(e1c, e2c, lc, margin)
    assert jnp.allclose(loss3, ref3, rtol=2e-4, atol=1e-2), (loss3, ref3)

    print("KERNEL_OK")
</pallas_src>

<mosaic_0001>
module attributes {stable_mosaic.version = 11 : i64} {
  func.func @_ssq_partial_kernel(%arg0: i32, %arg1: i32, %arg2: i32, %arg3: memref<16x128xf32, #tpu.memory_space<vmem>>, %arg4: memref<16x128xf32, #tpu.memory_space<vmem>>, %arg5: memref<1x8x128xf32, #tpu.memory_space<vmem>>) attributes {dimension_semantics = [#tpu.dimension_semantics<parallel>, #tpu.dimension_semantics<arbitrary>, #tpu.dimension_semantics<arbitrary>], iteration_bounds = array<i64: 1, 1, 1>, scalar_prefetch = 0 : i64, scratch_operands = 0 : i64, tpu.core_type = #tpu.core_type<tc>, window_params = [{transform_indices = @transform_0, window_bounds = array<i64: 16, 128>}, {transform_indices = @transform_1, window_bounds = array<i64: 16, 128>}, {transform_indices = @transform_2, window_bounds = array<i64: 1, 8, 128>}]} {
    %c0_i32 = arith.constant 0 : i32
    %0 = arith.cmpi eq, %arg2, %c0_i32 : i32
    %1 = arith.extui %0 : i1 to i32
    %c0_i32_0 = arith.constant 0 : i32
    %2 = arith.cmpi ne, %1, %c0_i32_0 : i32
    scf.if %2 {
      %cst_10 = arith.constant 0.000000e+00 : f32
      %15 = vector.broadcast %cst_10 : f32 to vector<8x128xf32>
      %c0_11 = arith.constant 0 : index
      %c0_12 = arith.constant 0 : index
      %c0_13 = arith.constant 0 : index
      %16 = vector.load %arg5[%c0_11, %c0_12, %c0_13] : memref<1x8x128xf32, #tpu.memory_space<vmem>>, vector<1x8x128xf32>
      %17 = vector.shape_cast %16 : vector<1x8x128xf32> to vector<8x128xf32>
      %18 = vector.shape_cast %15 : vector<8x128xf32> to vector<1x8x128xf32>
      tpu.vector_store %arg5[%c0_11, %c0_12, %c0_13], %18 {strides = array<i32>} : memref<1x8x128xf32, #tpu.memory_space<vmem>>, vector<1x8x128xf32>,
    } else {
    }
    %c0 = arith.constant 0 : index
    %c0_1 = arith.constant 0 : index
    %3 = vector.load %arg3[%c0, %c0_1] : memref<16x128xf32, #tpu.memory_space<vmem>>, vector<16x128xf32>
    %c0_2 = arith.constant 0 : index
    %c0_3 = arith.constant 0 : index
    %4 = vector.load %arg4[%c0_2, %c0_3] : memref<16x128xf32, #tpu.memory_space<vmem>>, vector<16x128xf32>
    %5 = arith.subf %3, %4 : vector<16x128xf32>
    %6 = arith.mulf %5, %5 : vector<16x128xf32>
    %c0_4 = arith.constant 0 : index
    %c0_5 = arith.constant 0 : index
    %c0_6 = arith.constant 0 : index
    %7 = vector.load %arg5[%c0_4, %c0_5, %c0_6] : memref<1x8x128xf32, #tpu.memory_space<vmem>>, vector<1x8x128xf32>
    %8 = vector.shape_cast %7 : vector<1x8x128xf32> to vector<8x128xf32>
    %9 = vector.shape_cast %6 : vector<16x128xf32> to vector<2x8x128xf32>
    %cst = arith.constant dense<0.000000e+00> : vector<8x128xf32>
    %10 = vector.multi_reduction <add>, %9, %cst [0] : vector<2x8x128xf32> to vector<8x128xf32>
    %11 = arith.addf %8, %10 : vector<8x128xf32>
    %c0_7 = arith.constant 0 : index
    %c0_8 = arith.constant 0 : index
    %c0_9 = arith.constant 0 : index
    %12 = vector.load %arg5[%c0_7, %c0_8, %c0_9] : memref<1x8x128xf32, #tpu.memory_space<vmem>>, vector<1x8x128xf32>
    %13 = vector.shape_cast %12 : vector<1x8x128xf32> to vector<8x128xf32>
    %14 = vector.shape_cast %11 : vector<8x128xf32> to vector<1x8x128xf32>
    tpu.vector_store %arg5[%c0_7, %c0_8, %c0_9], %14 {strides = array<i32>} : memref<1x8x128xf32, #tpu.memory_space<vmem>>, vector<1x8x128xf32>,
    return
  }
  func.func @transform_0(%arg0: i32, %arg1: i32, %arg2: i32) -> (i32, i32) {
    %c1_i32 = arith.constant 1 : i32
    %0 = arith.muli %arg0, %c1_i32 : i32
    %1 = arith.addi %0, %arg2 : i32
    %c0_i32 = arith.constant 0 : i32
    return %1, %arg1 : i32, i32
  }
  func.func @transform_1(%arg0: i32, %arg1: i32, %arg2: i32) -> (i32, i32) {
    %c1_i32 = arith.constant 1 : i32
    %0 = arith.muli %arg0, %c1_i32 : i32
    %1 = arith.addi %0, %arg2 : i32
    %c0_i32 = arith.constant 0 : i32
    return %1, %arg1 : i32, i32
  }
  func.func @transform_2(%arg0: i32, %arg1: i32, %arg2: i32) -> (i32, i32, i32) {
    %c0_i32 = arith.constant 0 : i32
    %c0_i32_0 = arith.constant 0 : i32
    return %arg0, %c0_i32, %arg1 : i32, i32, i32
  }
}

</mosaic_0001>

<llo_original>
// kernel: tpu_custom_call.1
$region0: #{tpu_custom_call.1}
  #allocation0 [shape = 'u32[]', space=smem, size = 0x4, offset = 0x4, fixed_abs, tag = 'smem constant byte address 0x4 - core index']
  #allocation1 [shape = 'u32[144,128]{1,0:T(1,128)}', space=vmem, size = 0x12000, scoped, tag = 'internal scratch']
  %s0 = inlined_call_operand.hbm [shape: f32[16,128], index: 0, kind: input, shape index: {}]
  %s1 = inlined_call_operand.hbm [shape: f32[16,128], index: 1, kind: input, shape index: {}]
  %s2 = inlined_call_operand.hbm [shape: f32[1,8,128], index: 2, kind: output, shape index: {}]
  %s3 = sld [smem:[#allocation0]]
  $region30: #{tpu_custom_call.1} parent=0
    _
  %s5 = ssub.s32 1, %s3
  %s6 = scalar_select 0, %s5, %s3
  $region1: #{tpu_custom_call.1} parent=0
    #allocation2 [shape = 'u8[8192]{0}', space=vmem, size = 0x2000, scoped, tag = 'input window, operand 0, single buffered']
    #allocation3 [shape = 's32[1]{0}', space=sflag, size = 0x4, scoped, tag = 'scoped memory for tpu_custom_call.1']
    #allocation4 [shape = 's32[1]{0}', space=sflag, size = 0x4, scoped, tag = 'scoped memory for tpu_custom_call.1']
    #allocation5 [shape = 'u8[8192]{0}', space=vmem, size = 0x2000, scoped, tag = 'input window, operand 1, single buffered']
    #allocation6 [shape = 's32[1]{0}', space=sflag, size = 0x4, scoped, tag = 'scoped memory for tpu_custom_call.1']
    #allocation7 [shape = 'u8[4096]{0}', space=vmem, size = 0x1000, scoped, tag = 'output window, operand 0, single buffered']
    %7 = vsyncpa [#allocation3], 0
    %8 = vsyncpa [#allocation6], 0
    %9 = vsyncpa [#allocation4], 0
    // Predicated region
    $region2: #{tpu_custom_call.1} parent=1 // pred_check
      _
    $region3: #{tpu_custom_call.1} parent=1 // pred_check_branch
      %11 = sbr.rel (0) target = $region5
    $region4: #{tpu_custom_call.1} parent=1 // pred_region
      %s12 = sadd.s32 0, 0
      %s13 = smul.u32 2, %s12
      %s15 = ssub.s32 256, 256
      %16 = vsyncadd [#allocation3], %s15
      %s17 = smul.addr %s13, 128
      %s18 = scalar_lea.hbm %s0, %s17
      %s19 = sshll.u32 [#allocation2], 4
      %s20 = int_to_ptr.vmem [resolvable:$true] %s19
      %25 = dma.hbm_to_vmem [thread:$0]  %s18, 256, %s20, [#allocation3], 128, 128, 8
    $region5: #{tpu_custom_call.1} parent=1 // pred_fallthru
      _
    // Predicated region
    $region6: #{tpu_custom_call.1} parent=1 // pred_check
      _
    $region7: #{tpu_custom_call.1} parent=1 // pred_check_branch
      %27 = sbr.rel (0) target = $region9
    $region8: #{tpu_custom_call.1} parent=1 // pred_region
      %s28 = sadd.s32 0, 0
      %s29 = smul.u32 2, %s28
      %s31 = ssub.s32 256, 256
      %32 = vsyncadd [#allocation6], %s31
      %s33 = smul.addr %s29, 128
      %s34 = scalar_lea.hbm %s1, %s33
      %s35 = sshll.u32 [#allocation5], 4
      %s36 = int_to_ptr.vmem [resolvable:$true] %s35
      %41 = dma.hbm_to_vmem [thread:$0]  %s34, 256, %s36, [#allocation6], 128, 128, 8
    $region9: #{tpu_custom_call.1} parent=1 // pred_fallthru
      _
    // Predicated region
    $region10: #{tpu_custom_call.1} parent=1 // pred_check
      _
    $region11: #{tpu_custom_call.1} parent=1 // pred_check_branch
      %43 = sbr.rel (0) target = $region13
    $region12: #{tpu_custom_call.1} parent=1 // pred_region
      %44 = dma.done [#allocation3], 256
    $region13: #{tpu_custom_call.1} parent=1 // pred_fallthru
      _
    // Predicated region
    $region14: #{tpu_custom_call.1} parent=1 // pred_check
      _
    $region15: #{tpu_custom_call.1} parent=1 // pred_check_branch
      %46 = sbr.rel (0) target = $region17
    $region16: #{tpu_custom_call.1} parent=1 // pred_region
      %47 = dma.done [#allocation6], 256
    $region17: #{tpu_custom_call.1} parent=1 // pred_fallthru
      _
    %s48 = sadd.s32 0, 0
    %s49 = smul.u32 2, %s48
    %s50 = sadd.s32 0, 0
    %s51 = smul.u32 2, %s50
    %p52 = scmp.eq.s32.totalorder 0, 0
    // Predicated region
    $region18: #{tpu_custom_call.1} parent=1 // pred_check
      %p53 = pneg %p52
    $region19: #{tpu_custom_call.1} parent=1 // pred_check_branch
      %55 = sbr.rel (%p53) target = $region21
    $region20: #{tpu_custom_call.1} parent=1 // pred_region
      %56 = vst [vmem:[#allocation7] sm:$0xff] 0.0
    $region21: #{tpu_custom_call.1} parent=1 // pred_fallthru
      _
    %v57 = vld [vmem:[#allocation2] sm:$0xff]
    %v58 = vld [vmem:[#allocation2 + $0x8] sm:$0xff]
    %v59 = vld [vmem:[#allocation5] sm:$0xff]
    %v60 = vld [vmem:[#allocation5 + $0x8] sm:$0xff]
    %v61 = vsub.f32 %v57, %v59
    %v62 = vsub.f32 %v58, %v60
    %v63 = vmul.f32 %v61, %v61
    %v64 = vmul.f32 %v62, %v62
    %v65 = vld [vmem:[#allocation7] sm:$0xff]
    %v66 = vadd.f32 %v63, %v64
    %v67 = vadd.f32 %v65, %v66
    %68 = vst [vmem:[#allocation7] sm:$0xff] %v67
    // Predicated region
    $region22: #{tpu_custom_call.1} parent=1 // pred_check
      _
    $region23: #{tpu_custom_call.1} parent=1 // pred_check_branch
      %70 = sbr.rel (0) target = $region25
    $region24: #{tpu_custom_call.1} parent=1 // pred_region
      %s72 = ssub.s32 128, 128
      %73 = vsyncadd [#allocation4], %s72
      %s75 = sshll.u32 [#allocation7], 4
      %s76 = int_to_ptr.vmem [resolvable:$true] %s75
      %78 = dma.vmem_to_hbm [thread:$0]  %s76, 128, %s2, [#allocation4]
    $region25: #{tpu_custom_call.1} parent=1 // pred_fallthru
      _
    // Predicated region
    $region26: #{tpu_custom_call.1} parent=1 // pred_check
      _
    $region27: #{tpu_custom_call.1} parent=1 // pred_check_branch
      %80 = sbr.rel (0) target = $region29
    $region28: #{tpu_custom_call.1} parent=1 // pred_region
      %81 = dma.done [#allocation4], 128
    $region29: #{tpu_custom_call.1} parent=1 // pred_fallthru
      _
    %82 = vsyncpa [#allocation3], 1
    %83 = vsyncpa [#allocation6], 1
    %84 = vsyncpa [#allocation4], 1

</llo_original>
